<compile_context>
chip_gen: v7x
topology: tpu7x:2x2x1
jax: 0.10.0
libtpu: 0.0.40
codegen_flags: <defaults>
</compile_context>

<pallas_src>
import functools

import jax
import jax.numpy as jnp
from jax.experimental import pallas as pl
from jax.experimental.pallas import tpu as pltpu


def _round_up(x: int, m: int) -> int:
    return ((x + m - 1) // m) * m


def _vmem_capacity_bytes() -> int:
    try:
        info = pltpu.get_tpu_info()
        cap = int(getattr(info, "vmem_capacity_bytes", 0))
        if cap > 0:
            return cap
    except Exception:
        pass
    return 64 << 20  # conservative fallback (v7x-sized VMEM)


def _residual_linear_kernel(x_lhs_ref, w_ref, b_ref, o_ref, *,
                            module_factor, tn, n_tiles, mxu_dtype):
    # x_lhs_ref: (TM, Hp) contraction panel, j-invariant -> stays VMEM-resident
    # w_ref:     (Hp, TN) weight column panel
    # b_ref:     (1,  TN) bias panel
    # o_ref:     (TM, TN)
    lhs = x_lhs_ref[...]
    if mxu_dtype is not None and lhs.dtype != mxu_dtype:
        lhs = lhs.astype(mxu_dtype)               # in-kernel cast for the MXU
    y = jnp.dot(lhs, w_ref[...], preferred_element_type=jnp.float32)
    y = y + b_ref[...].astype(jnp.float32)
    if module_factor != 1.0:                      # static: resolved at trace time
        y = y * jnp.float32(module_factor)
    # Residual: aligned VMEM slice of the resident LHS panel (no second HBM pass).
    if n_tiles == 1:
        res = x_lhs_ref[...]
    else:
        j = pl.program_id(1)
        res = x_lhs_ref[:, pl.ds(pl.multiple_of(j * tn, 128), tn)]
    o_ref[...] = (y + res.astype(jnp.float32)).astype(o_ref.dtype)


def residual_connection_module(x, weight, bias, module_factor=1.0,
                               mxu_dtype=None):
    """out = (x @ weight + bias) * module_factor + x

    x:      (batch, seq, hidden)
    weight: (hidden, hidden)   -- (in, out) layout (torch weight.T)
    bias:   (hidden,)
    mxu_dtype: e.g. jnp.bfloat16 to feed the MXU reduced precision
               (f32 accumulation/epilogue kept); None = exact in x.dtype.
    """
    batch, seq, hidden = x.shape
    m = batch * seq

    isz_x = jnp.dtype(x.dtype).itemsize
    w_in = weight if mxu_dtype is None else weight.astype(mxu_dtype)
    isz_w = jnp.dtype(w_in.dtype).itemsize

    # ---- generation-aware tile plan -----------------------------------------
    vmem_cap = _vmem_capacity_bytes()
    big_vmem = vmem_cap >= (96 << 20)          # v5e/v6e (128 MiB) vs v7x (64 MiB)
    tm_cap = 1024 if big_vmem else 512
    tn_cap = 1024 if big_vmem else 512

    # K and N share one padded size so the residual slices out of the LHS panel.
    h_p = _round_up(hidden, 128)
    if h_p <= tn_cap:
        tn = h_p
    else:
        tn = 128
        for cand in range(tn_cap, 127, -128):  # largest 128-multiple divisor
            if h_p % cand == 0:
                tn = cand
                break
        if tn < 256:                           # awkward hidden: pad up, keep TN wide
            h_p = _round_up(h_p, tn_cap)
            tn = tn_cap

    pack = max(8, 32 // isz_x)                 # sublane packing (8 f32 / 16 bf16 / 32 i8)
    if m <= tm_cap:
        tm = max(128, _round_up(m, pack))
    else:
        tm = tm_cap
        for cand in range(tm_cap, 255, -128):  # prefer a divisor of m -> no M pad
            if m % cand == 0:
                tm = cand
                break

    # Keep the double-buffered working set inside a per-generation VMEM budget.
    def vmem_need(tm_, tn_):
        return (2 * tm_ * h_p * isz_x          # LHS panel (also the residual source)
                + 2 * h_p * tn_ * isz_w        # weight panel
                + 2 * 8 * tn_ * isz_w          # bias panel (sublane-padded)
                + 2 * tm_ * tn_ * isz_x)       # output tile

    budget = int(vmem_cap * 0.70)
    while vmem_need(tm, tn) > budget and tm > 128:
        tm = max(128, _round_up(tm // 2, pack))
    while (vmem_need(tm, tn) > budget and tn > 256
           and (tn // 2) % 128 == 0 and h_p % (tn // 2) == 0):
        tn //= 2
    # TODO(synk): if it still does not fit (huge hidden), add the K-split path.

    m_p = _round_up(m, tm)
    grid = (m_p // tm, h_p // tn)

    # ---- pad only when actually needed (pad-free fast path) ------------------
    x2d = x.reshape(m, hidden)
    if (m_p, h_p) != (m, hidden):
        x2d = jnp.pad(x2d, ((0, m_p - m), (0, h_p - hidden)))
    w_p = w_in
    b2d = bias.reshape(1, hidden)
    if h_p != hidden:
        w_p = jnp.pad(w_in, ((0, h_p - hidden), (0, h_p - hidden)))
        b2d = jnp.pad(b2d, ((0, 0), (0, h_p - hidden)))

    kernel = functools.partial(
        _residual_linear_kernel,
        module_factor=float(module_factor), tn=tn,
        n_tiles=grid[1], mxu_dtype=mxu_dtype)

    # Advisory cost: weight is re-streamed once per M tile; x read once.
    n_m_tiles = grid[0]
    cost = pl.CostEstimate(
        flops=2 * m_p * h_p * h_p,
        transcendentals=0,
        bytes_accessed=(m_p * h_p * isz_x
                        + n_m_tiles * h_p * h_p * isz_w
                        + n_m_tiles * h_p * isz_w
                        + m_p * h_p * isz_x),
    )

    need = vmem_need(tm, tn)
    vmem_limit = min(max(need + (4 << 20), 16 << 20), int(vmem_cap * 0.9))
    vmem_limit = max(vmem_limit, need)

    out2d = pl.pallas_call(
        kernel,
        out_shape=jax.ShapeDtypeStruct((m_p, h_p), x.dtype),
        grid_spec=pltpu.PrefetchScalarGridSpec(
            num_scalar_prefetch=0,
            grid=grid,
            in_specs=[
                pl.BlockSpec((tm, h_p), lambda i, j: (i, 0)),   # LHS panel (+ residual)
                pl.BlockSpec((h_p, tn), lambda i, j: (0, j)),   # weight column panel
                pl.BlockSpec((1, tn),   lambda i, j: (0, j)),   # bias panel
            ],
            out_specs=pl.BlockSpec((tm, tn), lambda i, j: (i, j)),
        ),
        compiler_params=pltpu.CompilerParams(
            # No reduction axis in the grid: both axes independent (megacore-friendly).
            dimension_semantics=("parallel", "parallel"),
            vmem_limit_bytes=int(vmem_limit),
        ),
        cost_estimate=cost,
    )(x2d, w_p, b2d)

    if (m_p, h_p) != (m, hidden):
        out2d = out2d[:m, :hidden]
    return out2d.reshape(batch, seq, hidden)


if __name__ == "__main__":
    batch, seq, hidden = 2, 8, 32
    module_factor = 0.5

    key = jax.random.PRNGKey(0)
    kx, kw, kb = jax.random.split(key, 3)

    x = jax.random.normal(kx, (batch, seq, hidden), dtype=jnp.float32)
    bound = 1.0 / (hidden ** 0.5)
    weight = jax.random.uniform(kw, (hidden, hidden), jnp.float32, -bound, bound)
    bias = jax.random.uniform(kb, (hidden,), jnp.float32, -bound, bound)

    ref = (x @ weight + bias) * module_factor + x

    # exact (f32) path
    out = residual_connection_module(x, weight, bias, module_factor)
    out = jax.block_until_ready(out)
    assert out.shape == x.shape
    assert jnp.allclose(out, ref, atol=1e-5, rtol=1e-5)

    # bf16 MXU path (halved HBM bytes for weight/x, ~2x MXU on v6e/v7x)
    out_bf16 = residual_connection_module(x, weight, bias, module_factor,
                                          mxu_dtype=jnp.bfloat16)
    out_bf16 = jax.block_until_ready(out_bf16)
    assert jnp.allclose(out_bf16, ref, atol=5e-2, rtol=5e-2)

    print("KERNEL_OK")
</pallas_src>

<mosaic_0001>
module attributes {stable_mosaic.version = 11 : i64} {
  func.func @_residual_linear_kernel(%arg0: i32, %arg1: i32, %arg2: memref<128x128xf32, #tpu.memory_space<vmem>>, %arg3: memref<128x128xf32, #tpu.memory_space<vmem>>, %arg4: memref<1x128xf32, #tpu.memory_space<vmem>>, %arg5: memref<128x128xf32, #tpu.memory_space<vmem>>) attributes {dimension_semantics = [#tpu.dimension_semantics<parallel>, #tpu.dimension_semantics<parallel>], iteration_bounds = array<i64: 1, 1>, scalar_prefetch = 0 : i64, scratch_operands = 0 : i64, tpu.core_type = #tpu.core_type<tc>, window_params = [{transform_indices = @transform_0, window_bounds = array<i64: 128, 128>}, {transform_indices = @transform_1, window_bounds = array<i64: 128, 128>}, {transform_indices = @transform_2, window_bounds = array<i64: 1, 128>}, {transform_indices = @transform_3, window_bounds = array<i64: 128, 128>}]} {
    %c0 = arith.constant 0 : index
    %c0_0 = arith.constant 0 : index
    %0 = vector.load %arg2[%c0, %c0_0] : memref<128x128xf32, #tpu.memory_space<vmem>>, vector<128x128xf32>
    %c0_1 = arith.constant 0 : index
    %c0_2 = arith.constant 0 : index
    %1 = vector.load %arg3[%c0_1, %c0_2] : memref<128x128xf32, #tpu.memory_space<vmem>>, vector<128x128xf32>
    %cst = arith.constant dense<0.000000e+00> : vector<128x128xf32>
    %2 = tpu.matmul %0, %1, %cst {dimension_numbers = #tpu.dot_dimension_numbers<[1], [0], [0], [1], [0, 0, 1, 1], [], []>} : vector<128x128xf32>, vector<128x128xf32>, vector<128x128xf32> -> vector<128x128xf32>
    %c0_3 = arith.constant 0 : index
    %c0_4 = arith.constant 0 : index
    %3 = vector.load %arg4[%c0_3, %c0_4] : memref<1x128xf32, #tpu.memory_space<vmem>>, vector<1x128xf32>
    %4 = vector.broadcast %3 : vector<1x128xf32> to vector<128x128xf32>
    %5 = arith.addf %2, %4 : vector<128x128xf32>
    %cst_5 = arith.constant 5.000000e-01 : f32
    %6 = vector.broadcast %cst_5 : f32 to vector<128x128xf32>
    %7 = arith.mulf %5, %6 : vector<128x128xf32>
    %c0_6 = arith.constant 0 : index
    %c0_7 = arith.constant 0 : index
    %8 = vector.load %arg2[%c0_6, %c0_7] : memref<128x128xf32, #tpu.memory_space<vmem>>, vector<128x128xf32>
    %9 = arith.addf %7, %8 : vector<128x128xf32>
    %c0_8 = arith.constant 0 : index
    %c0_9 = arith.constant 0 : index
    %10 = vector.load %arg5[%c0_8, %c0_9] : memref<128x128xf32, #tpu.memory_space<vmem>>, vector<128x128xf32>
    tpu.vector_store %arg5[%c0_8, %c0_9], %9 {strides = array<i32>} : memref<128x128xf32, #tpu.memory_space<vmem>>, vector<128x128xf32>,
    return
  }
  func.func @transform_0(%arg0: i32, %arg1: i32) -> (i32, i32) {
    %c0_i32 = arith.constant 0 : i32
    %c0_i32_0 = arith.constant 0 : i32
    return %arg0, %c0_i32 : i32, i32
  }
  func.func @transform_1(%arg0: i32, %arg1: i32) -> (i32, i32) {
    %c0_i32 = arith.constant 0 : i32
    %c0_i32_0 = arith.constant 0 : i32
    return %c0_i32, %arg1 : i32, i32
  }
  func.func @transform_2(%arg0: i32, %arg1: i32) -> (i32, i32) {
    %c0_i32 = arith.constant 0 : i32
    %c0_i32_0 = arith.constant 0 : i32
    return %c0_i32, %arg1 : i32, i32
  }
  func.func @transform_3(%arg0: i32, %arg1: i32) -> (i32, i32) {
    %c0_i32 = arith.constant 0 : i32
    return %arg0, %arg1 : i32, i32
  }
}

</mosaic_0001>

<llo_original>
// kernel: tpu_custom_call.1
$region0: #{tpu_custom_call.1}
  #allocation0 [shape = 'u32[]', space=smem, size = 0x4, offset = 0x4, fixed_abs, tag = 'smem constant byte address 0x4 - core index']
  #allocation1 [shape = 'u32[144,128]{1,0:T(1,128)}', space=vmem, size = 0x12000, scoped, tag = 'internal scratch']
  %s0 = inlined_call_operand.hbm [shape: f32[128,128], index: 0, kind: input, shape index: {}]
  %s1 = inlined_call_operand.hbm [shape: f32[128,128], index: 1, kind: input, shape index: {}]
  %s2 = inlined_call_operand.vmem [shape: f32[1,128], index: 2, kind: input, shape index: {}]
  %s3 = inlined_call_operand.hbm [shape: f32[128,128], index: 3, kind: output, shape index: {}]
  %s4 = sld [smem:[#allocation0]]
  $region30: #{tpu_custom_call.1} parent=0
    _
  %s6 = ssub.s32 1, %s4
  %s7 = scalar_select 0, %s6, %s4
  $region1: #{tpu_custom_call.1} parent=0
    #allocation2 [shape = 'u8[65536]{0}', space=vmem, size = 0x10000, scoped, tag = 'input window, operand 0, single buffered']
    #allocation3 [shape = 's32[1]{0}', space=sflag, size = 0x4, scoped, tag = 'scoped memory for tpu_custom_call.1']
    #allocation4 [shape = 's32[1]{0}', space=sflag, size = 0x4, scoped, tag = 'scoped memory for tpu_custom_call.1']
    #allocation5 [shape = 'u8[65536]{0}', space=vmem, size = 0x10000, scoped, tag = 'input window, operand 1, single buffered']
    #allocation6 [shape = 's32[1]{0}', space=sflag, size = 0x4, scoped, tag = 'scoped memory for tpu_custom_call.1']
    #allocation7 [shape = 'u8[65536]{0}', space=vmem, size = 0x10000, scoped, tag = 'output window, operand 0, single buffered']
    %8 = vsyncpa [#allocation3], 0
    %9 = vsyncpa [#allocation6], 0
    %10 = vsyncpa [#allocation4], 0
    // Predicated region
    $region2: #{tpu_custom_call.1} parent=1 // pred_check
      _
    $region3: #{tpu_custom_call.1} parent=1 // pred_check_branch
      %12 = sbr.rel (0) target = $region5
    $region4: #{tpu_custom_call.1} parent=1 // pred_region
      %s14 = ssub.s32 2048, 2048
      %15 = vsyncadd [#allocation3], %s14
      %s16 = sshll.u32 [#allocation2], 4
      %s17 = int_to_ptr.vmem [resolvable:$true] %s16
      %22 = dma.hbm_to_vmem [thread:$0]  %s0, 2048, %s17, [#allocation3], 128, 128, 8
    $region5: #{tpu_custom_call.1} parent=1 // pred_fallthru
      _
    // Predicated region
    $region6: #{tpu_custom_call.1} parent=1 // pred_check
      _
    $region7: #{tpu_custom_call.1} parent=1 // pred_check_branch
      %24 = sbr.rel (0) target = $region9
    $region8: #{tpu_custom_call.1} parent=1 // pred_region
      %s26 = ssub.s32 2048, 2048
      %27 = vsyncadd [#allocation6], %s26
      %s28 = sshll.u32 [#allocation5], 4
      %s29 = int_to_ptr.vmem [resolvable:$true] %s28
      %34 = dma.hbm_to_vmem [thread:$0]  %s1, 2048, %s29, [#allocation6], 128, 128, 8
    $region9: #{tpu_custom_call.1} parent=1 // pred_fallthru
      _
    // Predicated region
    $region10: #{tpu_custom_call.1} parent=1 // pred_check
      _
    $region11: #{tpu_custom_call.1} parent=1 // pred_check_branch
      %36 = sbr.rel (0) target = $region13
    $region12: #{tpu_custom_call.1} parent=1 // pred_region
      _
    $region13: #{tpu_custom_call.1} parent=1 // pred_fallthru
      _
    // Predicated region
    $region14: #{tpu_custom_call.1} parent=1 // pred_check
      _
    $region15: #{tpu_custom_call.1} parent=1 // pred_check_branch
      %38 = sbr.rel (0) target = $region17
    $region16: #{tpu_custom_call.1} parent=1 // pred_region
      %39 = dma.done [#allocation3], 2048
    $region17: #{tpu_custom_call.1} parent=1 // pred_fallthru
      _
    // Predicated region
    $region18: #{tpu_custom_call.1} parent=1 // pred_check
      _
    $region19: #{tpu_custom_call.1} parent=1 // pred_check_branch
      %41 = sbr.rel (0) target = $region21
    $region20: #{tpu_custom_call.1} parent=1 // pred_region
      %42 = dma.done [#allocation6], 2048
    $region21: #{tpu_custom_call.1} parent=1 // pred_fallthru
      _
    %v43 = vld [vmem:[#allocation2] sm:$0xff]
    %v44 = vld [vmem:[#allocation2 + $0x8] sm:$0xff]
    %v45 = vld [vmem:[#allocation2 + $0x10] sm:$0xff]
    %v46 = vld [vmem:[#allocation2 + $0x18] sm:$0xff]
    %v47 = vld [vmem:[#allocation2 + $0x20] sm:$0xff]
    %v48 = vld [vmem:[#allocation2 + $0x28] sm:$0xff]
    %v49 = vld [vmem:[#allocation2 + $0x30] sm:$0xff]
    %v50 = vld [vmem:[#allocation2 + $0x38] sm:$0xff]
    %v51 = vld [vmem:[#allocation2 + $0x40] sm:$0xff]
    %v52 = vld [vmem:[#allocation2 + $0x48] sm:$0xff]
    %v53 = vld [vmem:[#allocation2 + $0x50] sm:$0xff]
    %v54 = vld [vmem:[#allocation2 + $0x58] sm:$0xff]
    %v55 = vld [vmem:[#allocation2 + $0x60] sm:$0xff]
    %v56 = vld [vmem:[#allocation2 + $0x68] sm:$0xff]
    %v57 = vld [vmem:[#allocation2 + $0x70] sm:$0xff]
    %v58 = vld [vmem:[#allocation2 + $0x78] sm:$0xff]
    %v59 = vld [vmem:[#allocation5] sm:$0xff]
    %v60 = vld [vmem:[#allocation5 + $0x8] sm:$0xff]
    %v61 = vld [vmem:[#allocation5 + $0x10] sm:$0xff]
    %v62 = vld [vmem:[#allocation5 + $0x18] sm:$0xff]
    %v63 = vld [vmem:[#allocation5 + $0x20] sm:$0xff]
    %v64 = vld [vmem:[#allocation5 + $0x28] sm:$0xff]
    %v65 = vld [vmem:[#allocation5 + $0x30] sm:$0xff]
    %v66 = vld [vmem:[#allocation5 + $0x38] sm:$0xff]
    %v67 = vld [vmem:[#allocation5 + $0x40] sm:$0xff]
    %v68 = vld [vmem:[#allocation5 + $0x48] sm:$0xff]
    %v69 = vld [vmem:[#allocation5 + $0x50] sm:$0xff]
    %v70 = vld [vmem:[#allocation5 + $0x58] sm:$0xff]
    %v71 = vld [vmem:[#allocation5 + $0x60] sm:$0xff]
    %v72 = vld [vmem:[#allocation5 + $0x68] sm:$0xff]
    %v73 = vld [vmem:[#allocation5 + $0x70] sm:$0xff]
    %v74 = vld [vmem:[#allocation5 + $0x78] sm:$0xff]
    %v75 = vld [vmem:[%s2] sm:$0x1]
    %v77 = vlaneseq
    %v78 = vshrl.u32 %v77, 7
    %v79 = vsub.s32 0, %v78
    %v80 = vrot.slane %v75, %v79
    %82 = vmatprep.subr.mxu0 0.0
    %83 = vmatpush1.msra.mxu0 %v59
    %84 = vmatprep.subr.mxu0 0.0
    %85 = vmatpush1.msra.mxu0 %v60
    %86 = vmatprep.subr.mxu0 0.0
    %87 = vmatpush1.msra.mxu0 %v61
    %88 = vmatprep.subr.mxu0 0.0
    %89 = vmatpush1.msra.mxu0 %v62
    %90 = vmatprep.subr.mxu0 0.0
    %91 = vmatpush1.msra.mxu0 %v63
    %92 = vmatprep.subr.mxu0 0.0
    %93 = vmatpush1.msra.mxu0 %v64
    %94 = vmatprep.subr.mxu0 0.0
    %95 = vmatpush1.msra.mxu0 %v65
    %96 = vmatprep.subr.mxu0 0.0
    %97 = vmatpush1.msra.mxu0 %v66
    %98 = vmatprep.subr.mxu0 0.0
    %99 = vmatpush1.msra.mxu0 %v67
    %100 = vmatprep.subr.mxu0 0.0
    %101 = vmatpush1.msra.mxu0 %v68
    %102 = vmatprep.subr.mxu0 0.0
    %103 = vmatpush1.msra.mxu0 %v69
    %104 = vmatprep.subr.mxu0 0.0
    %105 = vmatpush1.msra.mxu0 %v70
    %106 = vmatprep.subr.mxu0 0.0
    %107 = vmatpush1.msra.mxu0 %v71
    %108 = vmatprep.subr.mxu0 0.0
    %109 = vmatpush1.msra.mxu0 %v72
    %110 = vmatprep.subr.mxu0 0.0
    %111 = vmatpush1.msra.mxu0 %v73
    %112 = vmatprep.subr.mxu0 0.0
    %113 = vmatpush1.msra.mxu0 %v74
    %114 = vmatprep.subr.mxu0 0.0
    %115 = vmatpush1.msra.mxu0 0.0
    %116 = vmatprep.subr.mxu0 0.0
    %117 = vmatpush1.msra.mxu0 0.0
    %118 = vmatprep.subr.mxu0 0.0
    %119 = vmatpush1.msra.mxu0 0.0
    %120 = vmatprep.subr.mxu0 0.0
    %121 = vmatpush1.msra.mxu0 0.0
    %122 = vmatprep.subr.mxu0 0.0
    %123 = vmatpush1.msra.mxu0 0.0
    %124 = vmatprep.subr.mxu0 0.0
    %125 = vmatpush1.msra.mxu0 0.0
    %126 = vmatprep.subr.mxu0 0.0
    %127 = vmatpush1.msra.mxu0 0.0
    %128 = vmatprep.subr.mxu0 0.0
    %129 = vmatpush1.msra.mxu0 0.0
    %130 = vmatprep.subr.mxu0 0.0
    %131 = vmatpush1.msra.mxu0 0.0
    %132 = vmatprep.subr.mxu0 0.0
    %133 = vmatpush1.msra.mxu0 0.0
    %134 = vmatprep.subr.mxu0 0.0
    %135 = vmatpush1.msra.mxu0 0.0
    %136 = vmatprep.subr.mxu0 0.0
    %137 = vmatpush1.msra.mxu0 0.0
    %138 = vmatprep.subr.mxu0 0.0
    %139 = vmatpush1.msra.mxu0 0.0
    %140 = vmatprep.subr.mxu0 0.0
    %141 = vmatpush1.msra.mxu0 0.0
    %142 = vmatprep.subr.mxu0 0.0
    %143 = vmatpush1.msra.mxu0 0.0
    %144 = vmatprep.subr.mxu0 0.0
    %145 = vmatpush1.msra.mxu0 0.0
    %146 = vmatprep.mubr.f32.mxu0 0.0
    %147 = vmatmul.mubr.f32.gmra.mrb[0].mxu0 %v43
    %v148 = vpop.f32.mrb[0].mxu0
    %v149 = vadd.f32 %v80, %v148
    %v150 = vpop.f32.mrb[0].mxu0
    %151 = vmatprep.mubr.f32.mxu0 0.0
    %152 = vmatmul.mubr.f32.gmra.mrb[0].mxu0 %v44
    %v153 = vpop.f32.mrb[0].mxu0
    %v154 = vadd.f32 %v80, %v153
    %v155 = vpop.f32.mrb[0].mxu0
    %156 = vmatprep.mubr.f32.mxu0 0.0
    %157 = vmatmul.mubr.f32.gmra.mrb[0].mxu0 %v45
    %v158 = vpop.f32.mrb[0].mxu0
    %v159 = vadd.f32 %v80, %v158
    %v160 = vpop.f32.mrb[0].mxu0
    %161 = vmatprep.mubr.f32.mxu0 0.0
    %162 = vmatmul.mubr.f32.gmra.mrb[0].mxu0 %v46
    %v163 = vpop.f32.mrb[0].mxu0
    %v164 = vadd.f32 %v80, %v163
    %v165 = vpop.f32.mrb[0].mxu0
    %166 = vmatprep.mubr.f32.mxu0 0.0
    %167 = vmatmul.mubr.f32.gmra.mrb[0].mxu0 %v47
    %v168 = vpop.f32.mrb[0].mxu0
    %v169 = vadd.f32 %v80, %v168
    %v170 = vpop.f32.mrb[0].mxu0
    %171 = vmatprep.mubr.f32.mxu0 0.0
    %172 = vmatmul.mubr.f32.gmra.mrb[0].mxu0 %v48
    %v173 = vpop.f32.mrb[0].mxu0
    %v174 = vadd.f32 %v80, %v173
    %v175 = vpop.f32.mrb[0].mxu0
    %176 = vmatprep.mubr.f32.mxu0 0.0
    %177 = vmatmul.mubr.f32.gmra.mrb[0].mxu0 %v49
    %v178 = vpop.f32.mrb[0].mxu0
    %v179 = vadd.f32 %v80, %v178
    %v180 = vpop.f32.mrb[0].mxu0
    %181 = vmatprep.mubr.f32.mxu0 0.0
    %182 = vmatmul.mubr.f32.gmra.mrb[0].mxu0 %v50
    %v183 = vpop.f32.mrb[0].mxu0
    %v184 = vadd.f32 %v80, %v183
    %v185 = vpop.f32.mrb[0].mxu0
    %186 = vmatprep.mubr.f32.mxu0 0.0
    %187 = vmatmul.mubr.f32.gmra.mrb[0].mxu0 %v51
    %v188 = vpop.f32.mrb[0].mxu0
    %v189 = vadd.f32 %v80, %v188
    %v190 = vpop.f32.mrb[0].mxu0
    %191 = vmatprep.mubr.f32.mxu0 0.0
    %192 = vmatmul.mubr.f32.gmra.mrb[0].mxu0 %v52
    %v193 = vpop.f32.mrb[0].mxu0
    %v194 = vadd.f32 %v80, %v193
    %v195 = vpop.f32.mrb[0].mxu0
    %196 = vmatprep.mubr.f32.mxu0 0.0
    %197 = vmatmul.mubr.f32.gmra.mrb[0].mxu0 %v53
    %v198 = vpop.f32.mrb[0].mxu0
    %v199 = vadd.f32 %v80, %v198
    %v200 = vpop.f32.mrb[0].mxu0
    %201 = vmatprep.mubr.f32.mxu0 0.0
    %202 = vmatmul.mubr.f32.gmra.mrb[0].mxu0 %v54
    %v203 = vpop.f32.mrb[0].mxu0
    %v204 = vadd.f32 %v80, %v203
    %v205 = vpop.f32.mrb[0].mxu0
    %206 = vmatprep.mubr.f32.mxu0 0.0
    %207 = vmatmul.mubr.f32.gmra.mrb[0].mxu0 %v55
    %v208 = vpop.f32.mrb[0].mxu0
    %v209 = vadd.f32 %v80, %v208
    %v210 = vpop.f32.mrb[0].mxu0
    %211 = vmatprep.mubr.f32.mxu0 0.0
    %212 = vmatmul.mubr.f32.gmra.mrb[0].mxu0 %v56
    %v213 = vpop.f32.mrb[0].mxu0
    %v214 = vadd.f32 %v80, %v213
    %v215 = vpop.f32.mrb[0].mxu0
    %216 = vmatprep.mubr.f32.mxu0 0.0
    %217 = vmatmul.mubr.f32.gmra.mrb[0].mxu0 %v57
    %v218 = vpop.f32.mrb[0].mxu0
    %v219 = vadd.f32 %v80, %v218
    %v220 = vpop.f32.mrb[0].mxu0
    %221 = vmatprep.mubr.f32.mxu0 0.0
    %222 = vmatmul.mubr.f32.gmra.mrb[0].mxu0 %v58
    %v223 = vpop.f32.mrb[0].mxu0
    %v224 = vadd.f32 %v80, %v223
    %v225 = vpop.f32.mrb[0].mxu0
    %226 = vdwg.mxu0
    %v227 = vmul.f32 %v149, 0.5
    %v228 = vmul.f32 %v154, 0.5
    %v229 = vmul.f32 %v159, 0.5
    %v230 = vmul.f32 %v164, 0.5
    %v231 = vmul.f32 %v169, 0.5
    %v232 = vmul.f32 %v174, 0.5
    %v233 = vmul.f32 %v179, 0.5
    %v234 = vmul.f32 %v184, 0.5
    %v235 = vmul.f32 %v189, 0.5
    %v236 = vmul.f32 %v194, 0.5
    %v237 = vmul.f32 %v199, 0.5
    %v238 = vmul.f32 %v204, 0.5
    %v239 = vmul.f32 %v209, 0.5
    %v240 = vmul.f32 %v214, 0.5
    %v241 = vmul.f32 %v219, 0.5
    %v242 = vmul.f32 %v224, 0.5
    %v243 = vadd.f32 %v227, %v43
    %v244 = vadd.f32 %v228, %v44
    %v245 = vadd.f32 %v229, %v45
    %v246 = vadd.f32 %v230, %v46
    %v247 = vadd.f32 %v231, %v47
    %v248 = vadd.f32 %v232, %v48
    %v249 = vadd.f32 %v233, %v49
    %v250 = vadd.f32 %v234, %v50
    %v251 = vadd.f32 %v235, %v51
    %v252 = vadd.f32 %v236, %v52
    %v253 = vadd.f32 %v237, %v53
    %v254 = vadd.f32 %v238, %v54
    %v255 = vadd.f32 %v239, %v55
    %v256 = vadd.f32 %v240, %v56
    %v257 = vadd.f32 %v241, %v57
    %v258 = vadd.f32 %v242, %v58
    %259 = vst [vmem:[#allocation7] sm:$0xff] %v243
    %260 = vst [vmem:[#allocation7 + $0x8] sm:$0xff] %v244
    %261 = vst [vmem:[#allocation7 + $0x10] sm:$0xff] %v245
    %262 = vst [vmem:[#allocation7 + $0x18] sm:$0xff] %v246
    %263 = vst [vmem:[#allocation7 + $0x20] sm:$0xff] %v247
    %264 = vst [vmem:[#allocation7 + $0x28] sm:$0xff] %v248
    %265 = vst [vmem:[#allocation7 + $0x30] sm:$0xff] %v249
    %266 = vst [vmem:[#allocation7 + $0x38] sm:$0xff] %v250
    %267 = vst [vmem:[#allocation7 + $0x40] sm:$0xff] %v251
    %268 = vst [vmem:[#allocation7 + $0x48] sm:$0xff] %v252
    %269 = vst [vmem:[#allocation7 + $0x50] sm:$0xff] %v253
    %270 = vst [vmem:[#allocation7 + $0x58] sm:$0xff] %v254
    %271 = vst [vmem:[#allocation7 + $0x60] sm:$0xff] %v255
    %272 = vst [vmem:[#allocation7 + $0x68] sm:$0xff] %v256
    %273 = vst [vmem:[#allocation7 + $0x70] sm:$0xff] %v257
    %274 = vst [vmem:[#allocation7 + $0x78] sm:$0xff] %v258
    // Predicated region
    $region22: #{tpu_custom_call.1} parent=1 // pred_check
      _
    $region23: #{tpu_custom_call.1} parent=1 // pred_check_branch
      %276 = sbr.rel (0) target = $region25
    $region24: #{tpu_custom_call.1} parent=1 // pred_region
      %s278 = ssub.s32 2048, 2048
      %279 = vsyncadd [#allocation4], %s278
      %s280 = sshll.u32 [#allocation7], 4
      %s281 = int_to_ptr.vmem [resolvable:$true] %s280
      %286 = dma.vmem_to_hbm [thread:$0]  %s281, 2048, %s3, [#allocation4], 128, 128, 8
    $region25: #{tpu_custom_call.1} parent=1 // pred_fallthru
      _
    // Predicated region
    $region26: #{tpu_custom_call.1} parent=1 // pred_check
      _
    $region27: #{tpu_custom_call.1} parent=1 // pred_check_branch
      %288 = sbr.rel (0) target = $region29
    $region28: #{tpu_custom_call.1} parent=1 // pred_region
      %289 = dma.done [#allocation4], 2048
    $region29: #{tpu_custom_call.1} parent=1 // pred_fallthru
      _
    %290 = vsyncpa [#allocation3], 1
    %291 = vsyncpa [#allocation6], 1
    %292 = vsyncpa [#allocation4], 1

</llo_original>
